<compile_context>
chip_gen: v5e
topology: v5e:2x2
jax: 0.10.0
libtpu: 0.0.40
codegen_flags: <defaults>
</compile_context>

<pallas_src>
import jax
import jax.numpy as jnp
from jax.experimental import pallas as pl
from jax.experimental.pallas import tpu as pltpu

EPS = 1e-5


def revin_norm_kernel(w_ref, b_ref, x_ref, o_ref):
    """RevIn 'norm': per-row (instance) mean/var over the time axis + affine.

    w_ref, b_ref : (1,) f32 scalar-prefetch refs in SMEM (affine weight/bias)
    x_ref        : (TB, L) tile in VMEM, native input dtype
    o_ref        : (TB, L) tile in VMEM, native output dtype
    """
    x = x_ref[...].astype(jnp.float32)                 # cast in VMEM, not on host
    inv_l = jnp.float32(1.0 / x.shape[-1])

    # Two-pass statistics (matches PyTorch RevIn numerics; tile is already
    # resident in VMEM so the second pass is free on a mem-bound kernel).
    mean = jnp.sum(x, axis=-1, keepdims=True) * inv_l          # (TB, 1)
    centered = x - mean
    var = jnp.sum(centered * centered, axis=-1, keepdims=True) * inv_l
    inv_std = jax.lax.rsqrt(var + EPS)

    # Fused affine epilogue: out = (x - mean) * (inv_std * w) + b.
    scale = inv_std * w_ref[0]
    o_ref[...] = (centered * scale + b_ref[0]).astype(o_ref.dtype)


def _round_up(x, m):
    return (x + m - 1) // m * m


def _tpu_vmem_bytes():
    try:
        return int(pltpu.get_tpu_info().vmem_capacity_bytes)
    except Exception:
        return 64 << 20  # conservative fallback: v7x per-TensorCore VMEM


def _pick_batch_tile(B, L, in_bytes, out_bytes):
    """Pick rows-per-block and an explicit VMEM limit.

    Budget the auto-pipelined footprint (2x input + 2x output double buffers)
    to <= min(VMEM/2, 32 MiB): ~8 MiB f32 blocks on v5e/v6e/v7x, which sits at
    the HBM roofline on all three generations while leaving headroom on v7x's
    64 MiB physical VMEM.  Also keep >= ~4 grid steps so both v7x TensorCores
    get >= 2 pipelined steps (this cap only binds when B is small, i.e. when
    the extra per-step overhead is negligible anyway).
    """
    vmem_cap = _tpu_vmem_bytes()
    pipe_budget = min(vmem_cap // 2, 32 << 20)
    per_row = 2 * L * (in_bytes + out_bytes)          # double-buffered bytes/row
    tb_vmem = max(8, (pipe_budget // per_row) // 8 * 8)
    tb_grid = max(8, _round_up(pl.cdiv(B, 4), 8))
    tb = min(tb_vmem, tb_grid)
    if B <= 8:
        tb = B                                        # full-extent block is legal
    vmem_limit = int(min(vmem_cap, pipe_budget + (16 << 20)))
    return int(tb), vmem_limit


def revin_norm(x, affine_weight, affine_bias, out_dtype=None):
    """x: [B, L, C=1] float -> [B, L, C=1] (RevIn 'norm' mode).

    Output dtype defaults to the input dtype (bf16 in -> bf16 out halves the
    HBM write traffic on this bandwidth-bound kernel).
    """
    B, L, C = x.shape
    assert C == 1, "RevIn was constructed with num_features=1"
    # TODO(synk): num_features > 1 needs per-channel stats/affine; this
    #             squeezed [B, L] layout only covers the num_features=1 case.
    out_dtype = x.dtype if out_dtype is None else out_dtype
    x2d = x.reshape(B, L)                              # drops trailing size-1 dim; no data movement
    w = affine_weight.reshape(1).astype(jnp.float32)
    b = affine_bias.reshape(1).astype(jnp.float32)

    in_bytes = jnp.dtype(x.dtype).itemsize
    out_bytes = jnp.dtype(out_dtype).itemsize
    tb, vmem_limit = _pick_batch_tile(B, L, in_bytes, out_bytes)

    # Ragged last block: no host-side jnp.pad and no trailing slice.  Padded
    # rows are only read (per-row math -> garbage stays in garbage rows) and
    # their writes are masked off by Pallas.
    grid = (pl.cdiv(B, tb),)

    out2d = pl.pallas_call(
        revin_norm_kernel,
        out_shape=jax.ShapeDtypeStruct((B, L), out_dtype),
        grid_spec=pltpu.PrefetchScalarGridSpec(
            num_scalar_prefetch=2,                     # w, b -> SMEM scalars
            grid=grid,
            in_specs=[
                pl.BlockSpec((tb, L), lambda i, w_r, b_r: (i, 0)),
            ],
            out_specs=pl.BlockSpec((tb, L), lambda i, w_r, b_r: (i, 0)),
        ),
        compiler_params=pltpu.CompilerParams(
            # Rows are independent -> shard the batch axis across TensorCores
            # (2x on v7x megacore); also enables DMA/compute pipelining.
            dimension_semantics=("parallel",),
            vmem_limit_bytes=vmem_limit,
        ),
        # TODO(synk): could pass input_output_aliases={2: 0} to reuse x's HBM
        #             buffer when the caller donates it; left off so callers
        #             (and these tests) may still read x afterwards.
    )(w, b, x2d)

    return out2d.reshape(B, L, C)


class BasicModelPallas:
    """Mirror of BasicModel.__init__ parameter structure (RevIn part only)."""

    def __init__(self, seq_len, pred_len, revin=True):
        self.seq_len = seq_len
        self.pred_len = pred_len
        self.revin = revin
        if revin:
            # RevIn(num_features=1) affine params (default init: w=1, b=0).
            self.rev_in_weight = jnp.ones((1,), dtype=jnp.float32)
            self.rev_in_bias = jnp.zeros((1,), dtype=jnp.float32)
        # TODO(synk): self.ts_model = PatchTST(configs) — backbone not provided.

    def forward(self, x):
        # Reference BasicModel.forward is `pass`; the RevIn normalization (the
        # only defined compute) is exposed as the kernel hot path.
        if self.revin:
            return revin_norm(x, self.rev_in_weight, self.rev_in_bias)
        return x


def _ref_revin(x, w, b):
    x = x.astype(jnp.float32)
    mean = jnp.mean(x, axis=1, keepdims=True)
    var = jnp.mean((x - mean) ** 2, axis=1, keepdims=True)  # unbiased=False
    return (x - mean) / jnp.sqrt(var + EPS) * w.reshape(1, 1, 1) + b.reshape(1, 1, 1)


if __name__ == "__main__":
    seq_len = 128
    pred_len = 32
    key = jax.random.PRNGKey(0)
    k0, k1, k2 = jax.random.split(key, 3)

    model = BasicModelPallas(seq_len=seq_len, pred_len=pred_len, revin=True)

    # --- Test 1: small batch, default affine params (single full-extent block) ---
    x_small = jax.random.normal(k0, (4, seq_len, 1), dtype=jnp.float32) * 3.0 + 2.0
    out_small = jax.block_until_ready(model.forward(x_small))
    ref_small = _ref_revin(x_small, model.rev_in_weight, model.rev_in_bias)
    assert out_small.shape == x_small.shape
    assert jnp.max(jnp.abs(out_small - ref_small)) < 1e-3

    # --- Test 2: non-trivial affine params, B not a multiple of the tile ->
    #             multi-step grid with a ragged (masked-write) last block ---
    w_nt = jnp.full((1,), 1.7, dtype=jnp.float32)
    b_nt = jnp.full((1,), -0.3, dtype=jnp.float32)
    x_med = jax.random.normal(k1, (300, seq_len, 1), dtype=jnp.float32) * 2.5 - 1.0
    out_med = jax.block_until_ready(revin_norm(x_med, w_nt, b_nt))
    ref_med = _ref_revin(x_med, w_nt, b_nt)
    assert out_med.shape == x_med.shape
    assert jnp.max(jnp.abs(out_med - ref_med)) < 1e-3

    # --- Test 3: bf16 input/output path (native-dtype HBM traffic, f32 math
    #             inside the kernel) ---
    x_bf16 = (jax.random.normal(k2, (64, seq_len, 1), dtype=jnp.float32) * 2.0 + 0.5
              ).astype(jnp.bfloat16)
    out_bf16 = jax.block_until_ready(revin_norm(x_bf16, w_nt, b_nt))
    ref_bf16 = _ref_revin(x_bf16, w_nt, b_nt)
    assert out_bf16.shape == x_bf16.shape
    assert out_bf16.dtype == jnp.bfloat16
    assert jnp.max(jnp.abs(out_bf16.astype(jnp.float32) - ref_bf16)) < 0.1

    print("KERNEL_OK")
</pallas_src>

<mosaic_0001>
module attributes {stable_mosaic.version = 11 : i64} {
  func.func @revin_norm_kernel(%arg0: i32, %arg1: memref<1xf32, #tpu.memory_space<smem>>, %arg2: memref<1xf32, #tpu.memory_space<smem>>, %arg3: memref<4x128xf32, #tpu.memory_space<vmem>>, %arg4: memref<4x128xf32, #tpu.memory_space<vmem>>) attributes {dimension_semantics = [#tpu.dimension_semantics<parallel>], iteration_bounds = array<i64: 1>, scalar_prefetch = 2 : i64, scratch_operands = 0 : i64, tpu.core_type = #tpu.core_type<tc>, window_params = [{transform_indices = @transform_0, window_bounds = array<i64: 4, 128>}, {transform_indices = @transform_1, window_bounds = array<i64: 4, 128>}]} {
    %c0 = arith.constant 0 : index
    %c0_0 = arith.constant 0 : index
    %0 = vector.load %arg3[%c0, %c0_0] : memref<4x128xf32, #tpu.memory_space<vmem>>, vector<4x128xf32>
    %cst = arith.constant dense<0.000000e+00> : vector<4xf32>
    %1 = vector.multi_reduction <add>, %0, %cst [1] : vector<4x128xf32> to vector<4xf32>
    %2 = vector.shape_cast %1 : vector<4xf32> to vector<4x1xf32>
    %cst_1 = arith.constant 7.812500e-03 : f32
    %3 = vector.broadcast %cst_1 : f32 to vector<4x1xf32>
    %4 = arith.mulf %2, %3 : vector<4x1xf32>
    %5 = vector.broadcast %4 : vector<4x1xf32> to vector<4x128xf32>
    %6 = arith.subf %0, %5 : vector<4x128xf32>
    %7 = arith.mulf %6, %6 : vector<4x128xf32>
    %cst_2 = arith.constant dense<0.000000e+00> : vector<4xf32>
    %8 = vector.multi_reduction <add>, %7, %cst_2 [1] : vector<4x128xf32> to vector<4xf32>
    %9 = vector.shape_cast %8 : vector<4xf32> to vector<4x1xf32>
    %cst_3 = arith.constant 7.812500e-03 : f32
    %10 = vector.broadcast %cst_3 : f32 to vector<4x1xf32>
    %11 = arith.mulf %9, %10 : vector<4x1xf32>
    %cst_4 = arith.constant 9.99999974E-6 : f32
    %12 = vector.broadcast %cst_4 : f32 to vector<4x1xf32>
    %13 = arith.addf %11, %12 : vector<4x1xf32>
    %14 = math.rsqrt %13 : vector<4x1xf32>
    %c0_5 = arith.constant 0 : index
    %15 = memref.load %arg1[%c0_5] : memref<1xf32, #tpu.memory_space<smem>>
    %16 = vector.broadcast %15 : f32 to vector<4x1xf32>
    %17 = arith.mulf %14, %16 : vector<4x1xf32>
    %18 = vector.broadcast %17 : vector<4x1xf32> to vector<4x128xf32>
    %19 = arith.mulf %6, %18 : vector<4x128xf32>
    %c0_6 = arith.constant 0 : index
    %20 = memref.load %arg2[%c0_6] : memref<1xf32, #tpu.memory_space<smem>>
    %21 = vector.broadcast %20 : f32 to vector<4x128xf32>
    %22 = arith.addf %19, %21 : vector<4x128xf32>
    %c0_7 = arith.constant 0 : index
    %c0_8 = arith.constant 0 : index
    %23 = vector.load %arg4[%c0_7, %c0_8] : memref<4x128xf32, #tpu.memory_space<vmem>>, vector<4x128xf32>
    tpu.vector_store %arg4[%c0_7, %c0_8], %22 {strides = array<i32>} : memref<4x128xf32, #tpu.memory_space<vmem>>, vector<4x128xf32>,
    return
  }
  func.func @transform_0(%arg0: i32, %arg1: memref<1xf32, #tpu.memory_space<smem>>, %arg2: memref<1xf32, #tpu.memory_space<smem>>) -> (i32, i32) {
    %c0_i32 = arith.constant 0 : i32
    %c0_i32_0 = arith.constant 0 : i32
    return %arg0, %c0_i32 : i32, i32
  }
  func.func @transform_1(%arg0: i32, %arg1: memref<1xf32, #tpu.memory_space<smem>>, %arg2: memref<1xf32, #tpu.memory_space<smem>>) -> (i32, i32) {
    %c0_i32 = arith.constant 0 : i32
    %c0_i32_0 = arith.constant 0 : i32
    return %arg0, %c0_i32 : i32, i32
  }
}

</mosaic_0001>

<llo_original>
// kernel: tpu_custom_call.1
$region0: #{tpu_custom_call.1}
  #allocation0 [shape = 'u32[]', space=smem, size = 0x4, offset = 0x4, fixed_abs, tag = 'smem constant byte address 0x4 - core index']
  #allocation1 [shape = 'u32[72,128]{1,0:T(1,128)}', space=vmem, size = 0x9000, scoped, tag = 'internal scratch']
  #allocation2 [shape = 's32[1]{0}', space=sflag, size = 0x4, scoped, tag = 'scoped memory for tpu_custom_call.1']
  #allocation3 [shape = 'f32[1]{0:T(128)S(6)}', space=smem, size = 0x200, scoped, tag = 'prefetched SMEM operand 0']
  #allocation4 [shape = 'f32[1]{0:T(128)S(6)}', space=smem, size = 0x200, scoped, tag = 'prefetched SMEM operand 1']
  %s0 = inlined_call_operand.<no memory space> [shape: f32[1], index: 0, kind: input, shape index: {}]
  %s1 = inlined_call_operand.<no memory space> [shape: f32[1], index: 1, kind: input, shape index: {}]
  %s2 = inlined_call_operand.vmem [shape: f32[4,128], index: 2, kind: input, shape index: {}]
  %s3 = inlined_call_operand.hbm [shape: f32[4,128], index: 3, kind: output, shape index: {}]
  %s4 = sld [smem:[#allocation0]]
  $region14: #{tpu_custom_call.1} parent=0
    _
  %s6 = ssub.s32 1, %s4
  %s7 = scalar_select 0, %s6, %s4
  %8 = sst [smem:[#allocation3]] %s0
  %9 = sst [smem:[#allocation4]] %s1
  $region1: #{tpu_custom_call.1} parent=0
    #allocation5 [shape = 'u8[2048]{0}', space=vmem, size = 0x800, scoped, tag = 'output window, operand 0, single buffered']
    #allocation6 [shape = 's32[1]{0}', space=sflag, size = 0x4, scoped, tag = 'scoped memory for tpu_custom_call.1']
    %10 = vsyncpa [#allocation6], 0
    // Predicated region
    $region2: #{tpu_custom_call.1} parent=1 // pred_check
      _
    $region3: #{tpu_custom_call.1} parent=1 // pred_check_branch
      %12 = sbr.rel (0) target = $region5
    $region4: #{tpu_custom_call.1} parent=1 // pred_region
      _
    $region5: #{tpu_custom_call.1} parent=1 // pred_fallthru
      _
    %v13 = vld [vmem:[%s2] sm:$0xf]
    %vm14 = vcmask 1043456
    %v15 = vsel %vm14, %v13, 0.0
    %16 = vadd.xlane.f32.xlu0 %v15
    %v17 = vpop.xlane.xlu0 %16
    %v18 = vmul.f32 %v17, 0.0078125
    %v19 = vsub.f32 %v13, %v18
    %v20 = vmul.f32 %v19, %v19
    %v21 = vsel %vm14, %v20, 0.0
    %22 = vadd.xlane.f32.xlu0 %v21
    %v23 = vpop.xlane.xlu0 %22
    %v24 = vmul.f32 %v23, 0.0078125
    %v25 = vadd.f32 %v24, 1e-05
    %v26 = vrsqrt.pop %v25
    %v27 = vmul.f32 %v26, %v25
    %v28 = vmul.f32 %v27, %v26
    %v29 = vmul.f32 0.5, %v28
    %v30 = vsub.f32 1.5, %v29
    %v31 = vmul.f32 %v26, %v30
    %vm32 = vweird.f32 %v25
    %vm33 = vweird.f32 %v26
    %vm34 = vmor %vm32, %vm33
    %v35 = vsel %vm34, %v26, %v31
    %s36 = sld [smem:[#allocation3]]
    %v37 = vstv %s36
    %v38 = vmul.f32 %v35, %v37
    %v39 = vmul.f32 %v19, %v38
    %s40 = sld [smem:[#allocation4]]
    %v41 = vstv %s40
    %v42 = vadd.f32 %v39, %v41
    %43 = vst [vmem:[#allocation5] sm:$0xf] %v42
    // Predicated region
    $region6: #{tpu_custom_call.1} parent=1 // pred_check
      _
    $region7: #{tpu_custom_call.1} parent=1 // pred_check_branch
      %45 = sbr.rel (0) target = $region9
    $region8: #{tpu_custom_call.1} parent=1 // pred_region
      %47 = vsyncadd [#allocation6], 0
      %s49 = sshll.u32 [#allocation5], 4
      %s50 = int_to_ptr.vmem [resolvable:$true] %s49
      %s51 = sshll.u32 %s3, 4
      %s52 = int_to_ptr.hbm [resolvable:$true] %s51
      %54 = dma.vmem_to_hbm [thread:$0]  %s50, 64, %s52, [#allocation6]
    $region9: #{tpu_custom_call.1} parent=1 // pred_fallthru
      _
    // Predicated region
    $region10: #{tpu_custom_call.1} parent=1 // pred_check
      _
    $region11: #{tpu_custom_call.1} parent=1 // pred_check_branch
      %56 = sbr.rel (0) target = $region13
    $region12: #{tpu_custom_call.1} parent=1 // pred_region
      %58 = dma.done [#allocation6], 64
    $region13: #{tpu_custom_call.1} parent=1 // pred_fallthru
      _
    %59 = vsyncpa [#allocation6], 1

</llo_original>
